<compile_context>
chip_gen: v7x
topology: tpu7x:2x2x1
jax: 0.10.0
libtpu: 0.0.40
codegen_flags: <defaults>
</compile_context>

<pallas_src>
import math
from functools import partial

import jax
import jax.numpy as jnp
from jax.experimental import pallas as pl
from jax.experimental.pallas import tpu as pltpu


def _round_up(n, m):
    return ((n + m - 1) // m) * m


def _proto_kernel(x_ref, w1_ref, w2_ref, o_ref, *, feat, hidden):
    # x_ref : (W_BLK, shot, feat)        instances of W_BLK ways
    # w1_ref: (W_BLK, feat+1, hidden)    [W1 ; b1] per way
    # w2_ref: (W_BLK, hidden+1, heads)   [W2 ; b2] per way
    # o_ref : (W_BLK, heads, feat)       per-way prototype embeddings
    x = x_ref[...]                                        # (W, S, F)
    w1 = w1_ref[...]                                      # (W, F+1, H)
    w2 = w2_ref[...]                                      # (W, H+1, K)

    # First linear + tanh (bias = last row of the packed weight).
    h = jnp.tanh(
        jnp.einsum("wsf,wfh->wsh", x, w1[:, :feat, :],
                   preferred_element_type=jnp.float32)
        + w1[:, feat:, :]                                 # (W, 1, H) broadcast
    )                                                     # (W, S, H)

    # Second linear -> attention logits.
    logits = (
        jnp.einsum("wsh,whk->wsk", h, w2[:, :hidden, :],
                   preferred_element_type=jnp.float32)
        + w2[:, hidden:, :]                               # (W, 1, K) broadcast
    )                                                     # (W, S, K)

    # Softmax over the shot axis (per way, per attention head).  `shot` is the
    # true, unpadded extent here, so no masking is needed.
    logits = logits - logits.max(axis=1, keepdims=True)
    p = jnp.exp(logits)                                   # (W, S, K)

    # Un-normalized attention readout, then scale rows by the exact reciprocal
    # of the per-head softmax denominator (cheaper than a full-tile divide).
    m_un = jnp.einsum("wsk,wsf->wkf", p, x,
                      preferred_element_type=jnp.float32)  # (W, K, F)
    inv = 1.0 / p.sum(axis=1)                              # (W, K), exact
    o_ref[...] = (m_un * inv[:, :, None]).astype(o_ref.dtype)


def pack_proto_embedding_params(w1_t, b1, w2_t, b2):
    """Fold biases into the weights ONCE (outside the per-call path).

    w1_t: (way, feat, hidden), b1: (way, hidden)
    w2_t: (way, hidden, heads), b2: (way, heads)
    returns  W1_packed (way, feat+1, hidden),  W2_packed (way, hidden+1, heads)
    """
    w1p = jnp.concatenate([w1_t, b1[:, None, :]], axis=1)
    w2p = jnp.concatenate([w2_t, b2[:, None, :]], axis=1)
    return w1p, w2p


def proto_embedding(x, w1_packed, w2_packed, *, ways_per_step=None):
    """Forward pass of Proto_Embedding.

    x         : (way, shot, feat)        float32
    w1_packed : (way, feat+1, hidden)    [W1 ; b1]
    w2_packed : (way, hidden+1, heads)   [W2 ; b2]
    returns (way, heads, feat)
    """
    way, shot, feat = x.shape
    hidden = w1_packed.shape[2]
    heads = w2_packed.shape[2]
    assert w1_packed.shape == (way, feat + 1, hidden)
    assert w2_packed.shape == (way, hidden + 1, heads)

    if ways_per_step is None:
        # Per-way block bytes (f32); the pipeline double-buffers each stream.
        per_way_bytes = 4 * (shot * feat + (feat + 1) * hidden
                             + (hidden + 1) * heads + heads * feat)
        # Keep total block bytes per step <= ~4 MiB so that, double-buffered,
        # we stay far below v5e's 16 MiB scoped-VMEM default (v6e/v7x: 32 MiB).
        vmem_budget = 4 << 20
        max_by_vmem = max(1, vmem_budget // max(per_way_bytes, 1))
        # >= 2 grid steps so v7x's two TensorCores both get work; the extra
        # ~0.35 us step on single-TC v5e/v6e is negligible.
        ways_per_step = min(max(pl.cdiv(way, 2), 1), max_by_vmem)
    w_blk = int(max(1, min(ways_per_step, way)))

    # Pad the way axis (leading, cheap) so the grid divides evenly.  Padded
    # ways compute a throwaway uniform softmax over zero inputs (no NaNs) and
    # are sliced off below.
    wp = _round_up(way, w_blk)
    if wp != way:
        x = jnp.pad(x, ((0, wp - way), (0, 0), (0, 0)))
        w1_packed = jnp.pad(w1_packed, ((0, wp - way), (0, 0), (0, 0)))
        w2_packed = jnp.pad(w2_packed, ((0, wp - way), (0, 0), (0, 0)))
    grid = (wp // w_blk,)

    flops = way * (2 * shot * feat * hidden
                   + 2 * shot * hidden * heads
                   + 2 * heads * shot * feat)
    transcendentals = way * (shot * hidden + shot * heads)   # tanh + exp
    bytes_accessed = 4 * way * (shot * feat + (feat + 1) * hidden
                                + (hidden + 1) * heads + heads * feat)

    out = pl.pallas_call(
        partial(_proto_kernel, feat=feat, hidden=hidden),
        out_shape=jax.ShapeDtypeStruct((wp, heads, feat), x.dtype),
        grid_spec=pltpu.PrefetchScalarGridSpec(
            num_scalar_prefetch=0,
            grid=grid,
            in_specs=[
                # Last-two block dims equal the full array dims -> exempt from
                # the (8,128) divisibility rule, and no HBM padding needed.
                pl.BlockSpec((w_blk, shot, feat), lambda i: (i, 0, 0)),        # x
                pl.BlockSpec((w_blk, feat + 1, hidden), lambda i: (i, 0, 0)),  # [W1;b1]
                pl.BlockSpec((w_blk, hidden + 1, heads), lambda i: (i, 0, 0)), # [W2;b2]
            ],
            out_specs=pl.BlockSpec((w_blk, heads, feat), lambda i: (i, 0, 0)),
        ),
        compiler_params=pltpu.CompilerParams(
            dimension_semantics=("parallel",),
        ),
        cost_estimate=pl.CostEstimate(
            flops=flops,
            transcendentals=transcendentals,
            bytes_accessed=bytes_accessed,
        ),
    )(x, w1_packed, w2_packed)

    return out[:way]


def proto_embedding_ref(x, w1_t, b1, w2_t, b2):
    """Plain-JAX reference, identical math to the PyTorch forward."""
    h = jnp.tanh(jnp.einsum("wsf,wfh->wsh", x, w1_t) + b1[:, None, :])
    logits = jnp.einsum("wsh,whk->wsk", h, w2_t) + b2[:, None, :]   # (way, shot, heads)
    atten = jax.nn.softmax(jnp.swapaxes(logits, 1, 2), axis=-1)     # (way, heads, shot)
    return jnp.einsum("wks,wsf->wkf", atten, x)                     # (way, heads, feat)


def init_proto_embedding_params(key, feat_dim, way, heads=5):
    """nn.Linear-style uniform init for each way's attention MLP."""
    hidden = feat_dim // 8
    b_in = 1.0 / math.sqrt(feat_dim)
    b_hid = 1.0 / math.sqrt(hidden)
    ks = jax.random.split(key, 4 * way)
    w1, b1, w2, b2 = [], [], [], []
    for i in range(way):
        k1, k2, k3, k4 = ks[4 * i: 4 * i + 4]
        w1.append(jax.random.uniform(k1, (feat_dim, hidden), jnp.float32, -b_in, b_in))
        b1.append(jax.random.uniform(k2, (hidden,), jnp.float32, -b_in, b_in))
        w2.append(jax.random.uniform(k3, (hidden, heads), jnp.float32, -b_hid, b_hid))
        b2.append(jax.random.uniform(k4, (heads,), jnp.float32, -b_hid, b_hid))
    return jnp.stack(w1), jnp.stack(b1), jnp.stack(w2), jnp.stack(b2)


if __name__ == "__main__":
    key = jax.random.PRNGKey(0)
    kx, kp = jax.random.split(key)

    # Small shapes consistent with the module: way classes, shot instances
    # each, feat_dim features (hidden = feat_dim // 8, 5 attention heads).
    way, shot, feat_dim = 4, 5, 32
    x = jax.random.normal(kx, (way, shot, feat_dim), jnp.float32)
    w1_t, b1, w2_t, b2 = init_proto_embedding_params(kp, feat_dim, way)

    # Bias folding happens once, outside the per-call path (weights are
    # reused across forward calls).
    w1_packed, w2_packed = pack_proto_embedding_params(w1_t, b1, w2_t, b2)
    w1_packed = jax.block_until_ready(w1_packed)
    w2_packed = jax.block_until_ready(w2_packed)

    out = proto_embedding(x, w1_packed, w2_packed)
    out = jax.block_until_ready(out)

    ref = proto_embedding_ref(x, w1_t, b1, w2_t, b2)
    assert out.shape == (way, 5, feat_dim), out.shape
    assert jnp.allclose(out, ref, atol=2e-5, rtol=2e-5), \
        float(jnp.max(jnp.abs(out - ref)))

    print("KERNEL_OK")
</pallas_src>

<mosaic_0001>
module attributes {stable_mosaic.version = 11 : i64} {
  func.func @_proto_kernel(%arg0: i32, %arg1: memref<2x5x32xf32, #tpu.memory_space<vmem>>, %arg2: memref<2x33x4xf32, #tpu.memory_space<vmem>>, %arg3: memref<2x5x5xf32, #tpu.memory_space<vmem>>, %arg4: memref<2x5x32xf32, #tpu.memory_space<vmem>>) attributes {dimension_semantics = [#tpu.dimension_semantics<parallel>], iteration_bounds = array<i64: 2>, scalar_prefetch = 0 : i64, scratch_operands = 0 : i64, tpu.core_type = #tpu.core_type<tc>, window_params = [{transform_indices = @transform_0, window_bounds = array<i64: 2, 5, 32>}, {transform_indices = @transform_1, window_bounds = array<i64: 2, 33, 4>}, {transform_indices = @transform_2, window_bounds = array<i64: 2, 5, 5>}, {transform_indices = @transform_3, window_bounds = array<i64: 2, 5, 32>}]} {
    %c0 = arith.constant 0 : index
    %c0_0 = arith.constant 0 : index
    %c0_1 = arith.constant 0 : index
    %0 = vector.load %arg1[%c0, %c0_0, %c0_1] : memref<2x5x32xf32, #tpu.memory_space<vmem>>, vector<2x5x32xf32>
    %c0_2 = arith.constant 0 : index
    %c0_3 = arith.constant 0 : index
    %c0_4 = arith.constant 0 : index
    %1 = vector.load %arg2[%c0_2, %c0_3, %c0_4] : memref<2x33x4xf32, #tpu.memory_space<vmem>>, vector<2x33x4xf32>
    %c0_5 = arith.constant 0 : index
    %c0_6 = arith.constant 0 : index
    %c0_7 = arith.constant 0 : index
    %2 = vector.load %arg3[%c0_5, %c0_6, %c0_7] : memref<2x5x5xf32, #tpu.memory_space<vmem>>, vector<2x5x5xf32>
    %3 = vector.extract_strided_slice %1 {offsets = [0, 0, 0], sizes = [2, 32, 4], strides = [1, 1, 1]} : vector<2x33x4xf32> to vector<2x32x4xf32>
    "tpu.trace_start"() <{level = 10 : i32, message = "wsf,wfh->wsh"}> : () -> ()
    %cst = arith.constant dense<0.000000e+00> : vector<2x5x4xf32>
    %4 = tpu.matmul %0, %3, %cst {dimension_numbers = #tpu.dot_dimension_numbers<[2], [1], [1], [2], [0, 0, 0, 1, 1, 2], [0], [0]>} : vector<2x5x32xf32>, vector<2x32x4xf32>, vector<2x5x4xf32> -> vector<2x5x4xf32>
    "tpu.trace_stop"() : () -> ()
    %5 = vector.extract_strided_slice %1 {offsets = [0, 32, 0], sizes = [2, 1, 4], strides = [1, 1, 1]} : vector<2x33x4xf32> to vector<2x1x4xf32>
    %6 = vector.broadcast %5 : vector<2x1x4xf32> to vector<2x5x4xf32>
    %7 = arith.addf %4, %6 : vector<2x5x4xf32>
    %8 = math.tanh %7 : vector<2x5x4xf32>
    %9 = vector.extract_strided_slice %2 {offsets = [0, 0, 0], sizes = [2, 4, 5], strides = [1, 1, 1]} : vector<2x5x5xf32> to vector<2x4x5xf32>
    "tpu.trace_start"() <{level = 10 : i32, message = "wsh,whk->wsk"}> : () -> ()
    %cst_8 = arith.constant dense<0.000000e+00> : vector<2x5x5xf32>
    %10 = tpu.matmul %8, %9, %cst_8 {dimension_numbers = #tpu.dot_dimension_numbers<[2], [1], [1], [2], [0, 0, 0, 1, 1, 2], [0], [0]>} : vector<2x5x4xf32>, vector<2x4x5xf32>, vector<2x5x5xf32> -> vector<2x5x5xf32>
    "tpu.trace_stop"() : () -> ()
    %11 = vector.extract_strided_slice %2 {offsets = [0, 4, 0], sizes = [2, 1, 5], strides = [1, 1, 1]} : vector<2x5x5xf32> to vector<2x1x5xf32>
    %12 = vector.broadcast %11 : vector<2x1x5xf32> to vector<2x5x5xf32>
    %13 = arith.addf %10, %12 : vector<2x5x5xf32>
    %cst_9 = arith.constant dense<0xFF800000> : vector<2x5xf32>
    %14 = vector.multi_reduction <maximumf>, %13, %cst_9 [1] : vector<2x5x5xf32> to vector<2x5xf32>
    %15 = vector.shape_cast %14 : vector<2x5xf32> to vector<2x1x5xf32>
    %16 = vector.broadcast %15 : vector<2x1x5xf32> to vector<2x5x5xf32>
    %17 = arith.subf %13, %16 : vector<2x5x5xf32>
    %18 = math.exp %17 : vector<2x5x5xf32>
    "tpu.trace_start"() <{level = 10 : i32, message = "wsk,wsf->wkf"}> : () -> ()
    %cst_10 = arith.constant dense<0.000000e+00> : vector<2x5x32xf32>
    %19 = tpu.matmul %18, %0, %cst_10 {dimension_numbers = #tpu.dot_dimension_numbers<[1], [1], [2], [2], [0, 0, 0, 2, 1, 2], [0], [0]>} : vector<2x5x5xf32>, vector<2x5x32xf32>, vector<2x5x32xf32> -> vector<2x5x32xf32>
    "tpu.trace_stop"() : () -> ()
    %cst_11 = arith.constant dense<0.000000e+00> : vector<2x5xf32>
    %20 = vector.multi_reduction <add>, %18, %cst_11 [1] : vector<2x5x5xf32> to vector<2x5xf32>
    %cst_12 = arith.constant 1.000000e+00 : f32
    %21 = vector.broadcast %cst_12 : f32 to vector<2x5xf32>
    %22 = arith.divf %21, %20 : vector<2x5xf32>
    %23 = vector.shape_cast %22 : vector<2x5xf32> to vector<2x5x1xf32>
    %24 = vector.broadcast %23 : vector<2x5x1xf32> to vector<2x5x32xf32>
    %25 = arith.mulf %19, %24 : vector<2x5x32xf32>
    %c0_13 = arith.constant 0 : index
    %c0_14 = arith.constant 0 : index
    %c0_15 = arith.constant 0 : index
    %26 = vector.load %arg4[%c0_13, %c0_14, %c0_15] : memref<2x5x32xf32, #tpu.memory_space<vmem>>, vector<2x5x32xf32>
    tpu.vector_store %arg4[%c0_13, %c0_14, %c0_15], %25 {strides = array<i32>} : memref<2x5x32xf32, #tpu.memory_space<vmem>>, vector<2x5x32xf32>,
    return
  }
  func.func @transform_0(%arg0: i32) -> (i32, i32, i32) {
    %c0_i32 = arith.constant 0 : i32
    %c0_i32_0 = arith.constant 0 : i32
    %c0_i32_1 = arith.constant 0 : i32
    return %arg0, %c0_i32, %c0_i32_0 : i32, i32, i32
  }
  func.func @transform_1(%arg0: i32) -> (i32, i32, i32) {
    %c0_i32 = arith.constant 0 : i32
    %c0_i32_0 = arith.constant 0 : i32
    %c0_i32_1 = arith.constant 0 : i32
    return %arg0, %c0_i32, %c0_i32_0 : i32, i32, i32
  }
  func.func @transform_2(%arg0: i32) -> (i32, i32, i32) {
    %c0_i32 = arith.constant 0 : i32
    %c0_i32_0 = arith.constant 0 : i32
    %c0_i32_1 = arith.constant 0 : i32
    return %arg0, %c0_i32, %c0_i32_0 : i32, i32, i32
  }
  func.func @transform_3(%arg0: i32) -> (i32, i32, i32) {
    %c0_i32 = arith.constant 0 : i32
    %c0_i32_0 = arith.constant 0 : i32
    %c0_i32_1 = arith.constant 0 : i32
    return %arg0, %c0_i32, %c0_i32_0 : i32, i32, i32
  }
}

</mosaic_0001>

<llo_original>
// kernel: tpu_custom_call.1
$region0: #{tpu_custom_call.1}
  #allocation0 [shape = 'u32[]', space=smem, size = 0x4, offset = 0x4, fixed_abs, tag = 'smem constant byte address 0x4 - core index']
  #allocation1 [shape = 'u32[144,128]{1,0:T(1,128)}', space=vmem, size = 0x12000, scoped, tag = 'internal scratch']
  %s0 = inlined_call_operand.vmem [shape: f32[4,5,32], index: 0, kind: input, shape index: {}]
  %s1 = inlined_call_operand.vmem [shape: f32[4,33,4], index: 1, kind: input, shape index: {}]
  %s2 = inlined_call_operand.vmem [shape: f32[4,5,5], index: 2, kind: input, shape index: {}]
  %s3 = inlined_call_operand.vmem [shape: f32[4,5,32], index: 3, kind: output, shape index: {}]
  %s4 = sld [smem:[#allocation0]]
  $region45: #{tpu_custom_call.1} parent=0
    _
  %s6 = ssub.s32 1, %s4
  %s7 = scalar_select 0, %s6, %s4
  loop: start=0, step=1, limit=4
  $region2: #{tpu_custom_call.1} parent=0 // loop_pre_header
    _
  $region3: #{tpu_custom_call.1} parent=0 // loop_header
    %s9 = sphi 0, %s13
    %p10 = scmp.ge.s32.totalorder %s9, 4
    %s19 = sphi 0, %s21
    %s22 = sphi 0, %s19
    %s23 = sphi 0, %s22
    %s39 = sphi 0, %s23
    %s45 = sphi 0, %s47
    %s48 = sphi 0, %s45
    %s49 = sphi 0, %s48
    %s65 = sphi 0, %s49
    %s71 = sphi 0, %s73
    %s74 = sphi 0, %s71
    %s75 = sphi 0, %s74
    %s91 = sphi 0, %s75
    %s97 = sphi 0, %s99
    %s100 = sphi 0, %s97
    %s101 = sphi 0, %s100
    %s117 = sphi 0, %s101
  $region4: #{tpu_custom_call.1} parent=0 // loop_header_branch
    %12 = sbr.rel (%p10) target = $region8
  $region5: #{tpu_custom_call.1} parent=0 // loop_body
    %s14 = ssub.s32 %s9, 1
    %s15 = ssub.s32 %s9, 2
    %s16 = sadd.s32 %s9, 1
    %s17 = ssub.s32 %s9, %s16
    %p18 = scmp.eq.s32.totalorder %s17, 0
    %s20 = sadd.s32 %s19, 1
    %s21 = scalar_select %p18, %s19, %s20
    %p24 = pneg %p18
    %p25 = scmp.eq.s32.totalorder %s9, 1
    %p26 = por %p24, %p25
    %p27 = scmp.ne.s32.totalorder %s19, %s22
    %p28 = scmp.eq.s32.totalorder %s9, 0
    %p29 = por %p27, %p28
    %p30 = scmp.ne.s32.totalorder %s19, %s22
    %p31 = scmp.eq.s32.totalorder %s14, 1
    %p32 = por %p30, %p31
    %p33 = scmp.ne.s32.totalorder %s22, %s23
    %p34 = scmp.eq.s32.totalorder %s14, 0
    %p35 = por %p33, %p34
    %p36 = scmp.ne.s32.totalorder %s22, %s23
    %p37 = scmp.eq.s32.totalorder %s15, 1
    %p38 = por %p36, %p37
    %p40 = scmp.ne.s32.totalorder %s23, %s39
    %p41 = scmp.eq.s32.totalorder %s15, 0
    %p42 = por %p40, %p41
    %s43 = ssub.s32 %s9, %s16
    %p44 = scmp.eq.s32.totalorder %s43, 0
    %s46 = sadd.s32 %s45, 1
    %s47 = scalar_select %p44, %s45, %s46
    %p50 = pneg %p44
    %p51 = scmp.eq.s32.totalorder %s9, 1
    %p52 = por %p50, %p51
    %p53 = scmp.ne.s32.totalorder %s45, %s48
    %p54 = scmp.eq.s32.totalorder %s9, 0
    %p55 = por %p53, %p54
    %p56 = scmp.ne.s32.totalorder %s45, %s48
    %p57 = scmp.eq.s32.totalorder %s14, 1
    %p58 = por %p56, %p57
    %p59 = scmp.ne.s32.totalorder %s48, %s49
    %p60 = scmp.eq.s32.totalorder %s14, 0
    %p61 = por %p59, %p60
    %p62 = scmp.ne.s32.totalorder %s48, %s49
    %p63 = scmp.eq.s32.totalorder %s15, 1
    %p64 = por %p62, %p63
    %p66 = scmp.ne.s32.totalorder %s49, %s65
    %p67 = scmp.eq.s32.totalorder %s15, 0
    %p68 = por %p66, %p67
    %s69 = ssub.s32 %s9, %s16
    %p70 = scmp.eq.s32.totalorder %s69, 0
    %s72 = sadd.s32 %s71, 1
    %s73 = scalar_select %p70, %s71, %s72
    %p76 = pneg %p70
    %p77 = scmp.eq.s32.totalorder %s9, 1
    %p78 = por %p76, %p77
    %p79 = scmp.ne.s32.totalorder %s71, %s74
    %p80 = scmp.eq.s32.totalorder %s9, 0
    %p81 = por %p79, %p80
    %p82 = scmp.ne.s32.totalorder %s71, %s74
    %p83 = scmp.eq.s32.totalorder %s14, 1
    %p84 = por %p82, %p83
    %p85 = scmp.ne.s32.totalorder %s74, %s75
    %p86 = scmp.eq.s32.totalorder %s14, 0
    %p87 = por %p85, %p86
    %p88 = scmp.ne.s32.totalorder %s74, %s75
    %p89 = scmp.eq.s32.totalorder %s15, 1
    %p90 = por %p88, %p89
    %p92 = scmp.ne.s32.totalorder %s75, %s91
    %p93 = scmp.eq.s32.totalorder %s15, 0
    %p94 = por %p92, %p93
    %s95 = ssub.s32 %s9, %s16
    %p96 = scmp.eq.s32.totalorder %s95, 0
    %s98 = sadd.s32 %s97, 1
    %s99 = scalar_select %p96, %s97, %s98
    %p102 = pneg %p96
    %p103 = scmp.eq.s32.totalorder %s9, 1
    %p104 = por %p102, %p103
    %p105 = scmp.ne.s32.totalorder %s97, %s100
    %p106 = scmp.eq.s32.totalorder %s9, 0
    %p107 = por %p105, %p106
    %p108 = scmp.ne.s32.totalorder %s97, %s100
    %p109 = scmp.eq.s32.totalorder %s14, 1
    %p110 = por %p108, %p109
    %p111 = scmp.ne.s32.totalorder %s100, %s101
    %p112 = scmp.eq.s32.totalorder %s14, 0
    %p113 = por %p111, %p112
    %p114 = scmp.ne.s32.totalorder %s100, %s101
    %p115 = scmp.eq.s32.totalorder %s15, 1
    %p116 = por %p114, %p115
    %p118 = scmp.ne.s32.totalorder %s101, %s117
    %p119 = scmp.eq.s32.totalorder %s15, 0
    %p120 = por %p118, %p119
    %p121 = scmp.le.s32.totalorder 1, %s9
    %p122 = scmp.lt.s32.totalorder %s9, 3
    %p123 = pnand %p121, %p122
    %p124 = pneg %p123
    // Predicated region
    $region9: #{tpu_custom_call.1} parent=5 // pred_check
      _
    $region10: #{tpu_custom_call.1} parent=5 // pred_check_branch
      %126 = sbr.rel (%p123) target = $region12
    $region11: #{tpu_custom_call.1} parent=5 // pred_region
      %s127 = ssub.s32 %s9, 1
    $region12: #{tpu_custom_call.1} parent=5 // pred_fallthru
      _
    %p128 = scmp.lt.s32.totalorder %s9, 2
    // Predicated region
    $region13: #{tpu_custom_call.1} parent=5 // pred_check
      %p129 = pneg %p128
    $region14: #{tpu_custom_call.1} parent=5 // pred_check_branch
      %131 = sbr.rel (%p129) target = $region16
    $region15: #{tpu_custom_call.1} parent=5 // pred_region
      // Predicated region
      $region17: #{tpu_custom_call.1} parent=15 // pred_check
        %p132 = pneg %p29
      $region18: #{tpu_custom_call.1} parent=15 // pred_check_branch
        %134 = sbr.rel (%p132) target = $region20
      $region19: #{tpu_custom_call.1} parent=15 // pred_region
        %s135 = smul.u32 2, %s9
        %p136 = scmp.lt.s32.totalorder %s135, 3
        %s137 = scalar_select %p136, %s135, 3
        %s138 = smul.addr %s137, 8
        %s139 = scalar_lea.vmem %s0, %s138
        %s140 = smul.u32 2, %s9
      $region20: #{tpu_custom_call.1} parent=15 // pred_fallthru
        _
      // Predicated region
      $region21: #{tpu_custom_call.1} parent=15 // pred_check
        %p141 = pneg %p55
      $region22: #{tpu_custom_call.1} parent=15 // pred_check_branch
        %143 = sbr.rel (%p141) target = $region24
      $region23: #{tpu_custom_call.1} parent=15 // pred_region
        %s144 = smul.u32 2, %s9
        %p145 = scmp.lt.s32.totalorder %s144, 3
        %s146 = scalar_select %p145, %s144, 3
        %s147 = smul.addr %s146, 5
        %s148 = smul.addr %s147, 8
        %s149 = scalar_lea.vmem %s1, %s148
        %s150 = smul.u32 2, %s9
      $region24: #{tpu_custom_call.1} parent=15 // pred_fallthru
        _
      // Predicated region
      $region25: #{tpu_custom_call.1} parent=15 // pred_check
        %p151 = pneg %p81
      $region26: #{tpu_custom_call.1} parent=15 // pred_check_branch
        %153 = sbr.rel (%p151) target = $region28
      $region27: #{tpu_custom_call.1} parent=15 // pred_region
        %s154 = smul.u32 2, %s9
        %p155 = scmp.lt.s32.totalorder %s154, 3
        %s156 = scalar_select %p155, %s154, 3
        %s157 = smul.addr %s156, 8
        %s158 = scalar_lea.vmem %s2, %s157
        %s159 = smul.u32 2, %s9
      $region28: #{tpu_custom_call.1} parent=15 // pred_fallthru
        _
    $region16: #{tpu_custom_call.1} parent=5 // pred_fallthru
      _
    %p160 = scmp.le.s32.totalorder 1, %s9
    %p161 = scmp.lt.s32.totalorder %s9, 3
    %p162 = pnand %p160, %p161
    %p163 = pneg %p162
    // Predicated region
    $region29: #{tpu_custom_call.1} parent=5 // pred_check
      _
    $region30: #{tpu_custom_call.1} parent=5 // pred_check_branch
      %165 = sbr.rel (%p162) target = $region32
    $region31: #{tpu_custom_call.1} parent=5 // pred_region
      %s166 = ssub.s32 %s9, 1
      %s167 = smul.u32 2, %s14
      %p168 = scmp.lt.s32.totalorder %s167, 3
      %s169 = scalar_select %p168, %s167, 3
      %s170 = smul.addr %s169, 8
      %s171 = scalar_lea.vmem %s0, %s170
      %p172 = pneg %p35
      %p173 = pneg %p32
      %s174 = smul.u32 2, %s14
      %p175 = scmp.lt.s32.totalorder %s174, 3
      %s176 = scalar_select %p175, %s174, 3
      %s177 = smul.addr %s176, 5
      %s178 = smul.addr %s177, 8
      %s179 = scalar_lea.vmem %s1, %s178
      %p180 = pneg %p61
      %p181 = pneg %p58
      %s182 = smul.u32 2, %s14
      %p183 = scmp.lt.s32.totalorder %s182, 3
      %s184 = scalar_select %p183, %s182, 3
      %s185 = smul.addr %s184, 8
      %s186 = scalar_lea.vmem %s2, %s185
      %p187 = pneg %p87
      %p188 = pneg %p84
      %p189 = pneg %p113
      %p190 = pneg %p110
      %s191 = smul.u32 2, %s14
      %p192 = scmp.lt.s32.totalorder %s191, 3
      %s193 = scalar_select %p192, %s191, 3
      %s194 = smul.addr %s193, 8
      %s195 = scalar_lea.vmem %s3, %s194
      %s196 = smul.u32 2, %s14
      %p197 = scmp.lt.s32.totalorder %s196, 3
      %s198 = scalar_select %p197, %s196, 3
      %s199 = smul.addr %s198, 8
      %s200 = scalar_lea.vmem %s0, %s199
      %s201 = smul.u32 2, %s14
      %s202 = smul.u32 2, %s14
      %p203 = scmp.lt.s32.totalorder %s202, 3
      %s204 = scalar_select %p203, %s202, 3
      %s205 = smul.addr %s204, 5
      %s206 = smul.addr %s205, 8
      %s207 = scalar_lea.vmem %s1, %s206
      %s208 = smul.u32 2, %s14
      %s209 = smul.u32 2, %s14
      %p210 = scmp.lt.s32.totalorder %s209, 3
      %s211 = scalar_select %p210, %s209, 3
      %s212 = smul.addr %s211, 8
      %s213 = scalar_lea.vmem %s2, %s212
      %s214 = smul.u32 2, %s14
      %s215 = smul.u32 2, %s14
      %p216 = scmp.lt.s32.totalorder %s215, 3
      %s217 = scalar_select %p216, %s215, 3
      %s218 = smul.addr %s217, 8
      %s219 = scalar_lea.vmem %s3, %s218
      %s220 = smul.u32 2, %s14
      %v221 = vld [vmem:[%s200] sm:$0x1f]
      %v222 = vld [vmem:[%s200 + $0x8] sm:$0x1f]
      %v223 = vld [vmem:[%s207] sm:$0xff]
      %v224 = vld [vmem:[%s207 + $0x8] sm:$0xff]
      %v225 = vld [vmem:[%s207 + $0x10] sm:$0xff]
      %v226 = vld [vmem:[%s207 + $0x18] sm:$0xff]
      %v227 = vld [vmem:[%s207 + $0x20] sm:$0x1]
      %v228 = vld [vmem:[%s207 + $0x28] sm:$0xff]
      %v229 = vld [vmem:[%s207 + $0x30] sm:$0xff]
      %v230 = vld [vmem:[%s207 + $0x38] sm:$0xff]
      %v231 = vld [vmem:[%s207 + $0x40] sm:$0xff]
      %v232 = vld [vmem:[%s207 + $0x48] sm:$0x1]
      %v233 = vld [vmem:[%s213] sm:$0x1f]
      %v234 = vld [vmem:[%s213 + $0x8] sm:$0x1f]
      %v235 = vlaneseq
      %v236 = vshrl.u32 %v235, 7
      %v237 = vsub.s32 0, %v236
      %v238 = vrot.slane %v227, %v237
      %v239 = vlaneseq
      %v240 = vshrl.u32 %v239, 7
      %v241 = vsub.s32 0, %v240
      %v242 = vrot.slane %v232, %v241
      %vm243 = vcmask 261120
      %v245 = vsel %vm243, %v221, 0
      %247 = vmatprep.subr.mxu0 0.0
      %248 = vmatpush1.msra.mxu0 %v223
      %249 = vmatprep.subr.mxu0 0.0
      %250 = vmatpush1.msra.mxu0 %v224
      %251 = vmatprep.subr.mxu0 0.0
      %252 = vmatpush1.msra.mxu0 %v225
      %253 = vmatprep.subr.mxu0 0.0
      %254 = vmatpush1.msra.mxu0 %v226
      %255 = vmatprep.subr.mxu0 0.0
      %256 = vmatpush1.msra.mxu0 0.0
      %257 = vmatprep.subr.mxu0 0.0
      %258 = vmatpush1.msra.mxu0 0.0
      %259 = vmatprep.subr.mxu0 0.0
      %260 = vmatpush1.msra.mxu0 0.0
      %261 = vmatprep.subr.mxu0 0.0
      %262 = vmatpush1.msra.mxu0 0.0
      %263 = vmatprep.subr.mxu0 0.0
      %264 = vmatpush1.msra.mxu0 0.0
      %265 = vmatprep.subr.mxu0 0.0
      %266 = vmatpush1.msra.mxu0 0.0
      %267 = vmatprep.subr.mxu0 0.0
      %268 = vmatpush1.msra.mxu0 0.0
      %269 = vmatprep.subr.mxu0 0.0
      %270 = vmatpush1.msra.mxu0 0.0
      %271 = vmatprep.subr.mxu0 0.0
      %272 = vmatpush1.msra.mxu0 0.0
      %273 = vmatprep.subr.mxu0 0.0
      %274 = vmatpush1.msra.mxu0 0.0
      %275 = vmatprep.subr.mxu0 0.0
      %276 = vmatpush1.msra.mxu0 0.0
      %277 = vmatprep.subr.mxu0 0.0
      %278 = vmatpush1.msra.mxu0 0.0
      %279 = vmatprep.subr.mxu0 0.0
      %280 = vmatpush1.msra.mxu0 0.0
      %281 = vmatprep.subr.mxu0 0.0
      %282 = vmatpush1.msra.mxu0 0.0
      %283 = vmatprep.subr.mxu0 0.0
      %284 = vmatpush1.msra.mxu0 0.0
      %285 = vmatprep.subr.mxu0 0.0
      %286 = vmatpush1.msra.mxu0 0.0
      %287 = vmatprep.subr.mxu0 0.0
      %288 = vmatpush1.msra.mxu0 0.0
      %289 = vmatprep.subr.mxu0 0.0
      %290 = vmatpush1.msra.mxu0 0.0
      %291 = vmatprep.subr.mxu0 0.0
      %292 = vmatpush1.msra.mxu0 0.0
      %293 = vmatprep.subr.mxu0 0.0
      %294 = vmatpush1.msra.mxu0 0.0
      %295 = vmatprep.subr.mxu0 0.0
      %296 = vmatpush1.msra.mxu0 0.0
      %297 = vmatprep.subr.mxu0 0.0
      %298 = vmatpush1.msra.mxu0 0.0
      %299 = vmatprep.subr.mxu0 0.0
      %300 = vmatpush1.msra.mxu0 0.0
      %301 = vmatprep.subr.mxu0 0.0
      %302 = vmatpush1.msra.mxu0 0.0
      %303 = vmatprep.subr.mxu0 0.0
      %304 = vmatpush1.msra.mxu0 0.0
      %305 = vmatprep.subr.mxu0 0.0
      %306 = vmatpush1.msra.mxu0 0.0
      %307 = vmatprep.subr.mxu0 0.0
      %308 = vmatpush1.msra.mxu0 0.0
      %309 = vmatprep.subr.mxu0 0.0
      %310 = vmatpush1.msra.mxu0 0.0
      %311 = vmatprep.mubr.f32.mxu0 0.0
      %312 = vmatmul.mubr.f32.gmra.mrb[0].mxu0 %v245
      %v313 = vpop.f32.mrb[0].mxu0
      %v314 = vadd.f32 %v238, %v313
      %v315 = vpop.f32.mrb[0].mxu0
      %316 = vdwg.mxu0
      %v318 = vsel %vm243, %v222, 0
      %320 = vmatprep.subr.mxu0 0.0
      %321 = vmatpush1.msra.mxu0 %v228
      %322 = vmatprep.subr.mxu0 0.0
      %323 = vmatpush1.msra.mxu0 %v229
      %324 = vmatprep.subr.mxu0 0.0
      %325 = vmatpush1.msra.mxu0 %v230
      %326 = vmatprep.subr.mxu0 0.0
      %327 = vmatpush1.msra.mxu0 %v231
      %328 = vmatprep.subr.mxu0 0.0
      %329 = vmatpush1.msra.mxu0 0.0
      %330 = vmatprep.subr.mxu0 0.0
      %331 = vmatpush1.msra.mxu0 0.0
      %332 = vmatprep.subr.mxu0 0.0
      %333 = vmatpush1.msra.mxu0 0.0
      %334 = vmatprep.subr.mxu0 0.0
      %335 = vmatpush1.msra.mxu0 0.0
      %336 = vmatprep.subr.mxu0 0.0
      %337 = vmatpush1.msra.mxu0 0.0
      %338 = vmatprep.subr.mxu0 0.0
      %339 = vmatpush1.msra.mxu0 0.0
      %340 = vmatprep.subr.mxu0 0.0
      %341 = vmatpush1.msra.mxu0 0.0
      %342 = vmatprep.subr.mxu0 0.0
      %343 = vmatpush1.msra.mxu0 0.0
      %344 = vmatprep.subr.mxu0 0.0
      %345 = vmatpush1.msra.mxu0 0.0
      %346 = vmatprep.subr.mxu0 0.0
      %347 = vmatpush1.msra.mxu0 0.0
      %348 = vmatprep.subr.mxu0 0.0
      %349 = vmatpush1.msra.mxu0 0.0
      %350 = vmatprep.subr.mxu0 0.0
      %351 = vmatpush1.msra.mxu0 0.0
      %352 = vmatprep.subr.mxu0 0.0
      %353 = vmatpush1.msra.mxu0 0.0
      %354 = vmatprep.subr.mxu0 0.0
      %355 = vmatpush1.msra.mxu0 0.0
      %356 = vmatprep.subr.mxu0 0.0
      %357 = vmatpush1.msra.mxu0 0.0
      %358 = vmatprep.subr.mxu0 0.0
      %359 = vmatpush1.msra.mxu0 0.0
      %360 = vmatprep.subr.mxu0 0.0
      %361 = vmatpush1.msra.mxu0 0.0
      %362 = vmatprep.subr.mxu0 0.0
      %363 = vmatpush1.msra.mxu0 0.0
      %364 = vmatprep.subr.mxu0 0.0
      %365 = vmatpush1.msra.mxu0 0.0
      %366 = vmatprep.subr.mxu0 0.0
      %367 = vmatpush1.msra.mxu0 0.0
      %368 = vmatprep.subr.mxu0 0.0
      %369 = vmatpush1.msra.mxu0 0.0
      %370 = vmatprep.subr.mxu0 0.0
      %371 = vmatpush1.msra.mxu0 0.0
      %372 = vmatprep.subr.mxu0 0.0
      %373 = vmatpush1.msra.mxu0 0.0
      %374 = vmatprep.subr.mxu0 0.0
      %375 = vmatpush1.msra.mxu0 0.0
      %376 = vmatprep.subr.mxu0 0.0
      %377 = vmatpush1.msra.mxu0 0.0
      %378 = vmatprep.subr.mxu0 0.0
      %379 = vmatpush1.msra.mxu0 0.0
      %380 = vmatprep.subr.mxu0 0.0
      %381 = vmatpush1.msra.mxu0 0.0
      %382 = vmatprep.subr.mxu0 0.0
      %383 = vmatpush1.msra.mxu0 0.0
      %384 = vmatprep.mubr.f32.mxu0 0.0
      %385 = vmatmul.mubr.f32.gmra.mrb[0].mxu0 %v318
      %v386 = vpop.f32.mrb[0].mxu0
      %v387 = vadd.f32 %v242, %v386
      %v388 = vpop.f32.mrb[0].mxu0
      %389 = vdwg.mxu0
      %v390 = vtanh.pop %v314
      %v391 = vtanh.pop %v387
      %v392 = vlaneseq
      %v393 = vshrl.u32 %v392, 7
      %v394 = vsub.s32 4, %v393
      %v395 = vrot.slane %v233, %v394
      %v396 = vlaneseq
      %v397 = vshrl.u32 %v396, 7
      %v398 = vsub.s32 4, %v397
      %v399 = vrot.slane %v234, %v398
      %vm400 = vcmask 31744
      %v402 = vsel %vm400, %v390, 0
      %vm404 = vcmask 1043456
      %v406 = vsel %vm404, %v233, 0
      %408 = vmatprep.subr.mxu0 0.0
      %409 = vmatpush1.msra.mxu0 %v406
      %410 = vmatprep.subr.mxu0 0.0
      %411 = vmatpush1.msra.mxu0 0.0
      %412 = vmatprep.subr.mxu0 0.0
      %413 = vmatpush1.msra.mxu0 0.0
      %414 = vmatprep.subr.mxu0 0.0
      %415 = vmatpush1.msra.mxu0 0.0
      %416 = vmatprep.subr.mxu0 0.0
      %417 = vmatpush1.msra.mxu0 0.0
      %418 = vmatprep.subr.mxu0 0.0
      %419 = vmatpush1.msra.mxu0 0.0
      %420 = vmatprep.subr.mxu0 0.0
      %421 = vmatpush1.msra.mxu0 0.0
      %422 = vmatprep.subr.mxu0 0.0
      %423 = vmatpush1.msra.mxu0 0.0
      %424 = vmatprep.subr.mxu0 0.0
      %425 = vmatpush1.msra.mxu0 0.0
      %426 = vmatprep.subr.mxu0 0.0
      %427 = vmatpush1.msra.mxu0 0.0
      %428 = vmatprep.subr.mxu0 0.0
      %429 = vmatpush1.msra.mxu0 0.0
      %430 = vmatprep.subr.mxu0 0.0
      %431 = vmatpush1.msra.mxu0 0.0
      %432 = vmatprep.subr.mxu0 0.0
      %433 = vmatpush1.msra.mxu0 0.0
      %434 = vmatprep.subr.mxu0 0.0
      %435 = vmatpush1.msra.mxu0 0.0
      %436 = vmatprep.subr.mxu0 0.0
      %437 = vmatpush1.msra.mxu0 0.0
      %438 = vmatprep.subr.mxu0 0.0
      %439 = vmatpush1.msra.mxu0 0.0
      %440 = vmatprep.subr.mxu0 0.0
      %441 = vmatpush1.msra.mxu0 0.0
      %442 = vmatprep.subr.mxu0 0.0
      %443 = vmatpush1.msra.mxu0 0.0
      %444 = vmatprep.subr.mxu0 0.0
      %445 = vmatpush1.msra.mxu0 0.0
      %446 = vmatprep.subr.mxu0 0.0
      %447 = vmatpush1.msra.mxu0 0.0
      %448 = vmatprep.subr.mxu0 0.0
      %449 = vmatpush1.msra.mxu0 0.0
      %450 = vmatprep.subr.mxu0 0.0
      %451 = vmatpush1.msra.mxu0 0.0
      %452 = vmatprep.subr.mxu0 0.0
      %453 = vmatpush1.msra.mxu0 0.0
      %454 = vmatprep.subr.mxu0 0.0
      %455 = vmatpush1.msra.mxu0 0.0
      %456 = vmatprep.subr.mxu0 0.0
      %457 = vmatpush1.msra.mxu0 0.0
      %458 = vmatprep.subr.mxu0 0.0
      %459 = vmatpush1.msra.mxu0 0.0
      %460 = vmatprep.subr.mxu0 0.0
      %461 = vmatpush1.msra.mxu0 0.0
      %462 = vmatprep.subr.mxu0 0.0
      %463 = vmatpush1.msra.mxu0 0.0
      %464 = vmatprep.subr.mxu0 0.0
      %465 = vmatpush1.msra.mxu0 0.0
      %466 = vmatprep.subr.mxu0 0.0
      %467 = vmatpush1.msra.mxu0 0.0
      %468 = vmatprep.subr.mxu0 0.0
      %469 = vmatpush1.msra.mxu0 0.0
      %470 = vmatprep.subr.mxu0 0.0
      %471 = vmatpush1.msra.mxu0 0.0
      %472 = vmatprep.mubr.f32.mxu0 0.0
      %473 = vmatmul.mubr.f32.gmra.mrb[0].mxu0 %v402
      %v474 = vpop.f32.mrb[0].mxu0
      %v475 = vadd.f32 %v395, %v474
      %v476 = vpop.f32.mrb[0].mxu0
      %477 = vdwg.mxu0
      %v479 = vsel %vm400, %v391, 0
      %v482 = vsel %vm404, %v234, 0
      %484 = vmatprep.subr.mxu0 0.0
      %485 = vmatpush1.msra.mxu0 %v482
      %486 = vmatprep.subr.mxu0 0.0
      %487 = vmatpush1.msra.mxu0 0.0
      %488 = vmatprep.subr.mxu0 0.0
      %489 = vmatpush1.msra.mxu0 0.0
      %490 = vmatprep.subr.mxu0 0.0
      %491 = vmatpush1.msra.mxu0 0.0
      %492 = vmatprep.subr.mxu0 0.0
      %493 = vmatpush1.msra.mxu0 0.0
      %494 = vmatprep.subr.mxu0 0.0
      %495 = vmatpush1.msra.mxu0 0.0
      %496 = vmatprep.subr.mxu0 0.0
      %497 = vmatpush1.msra.mxu0 0.0
      %498 = vmatprep.subr.mxu0 0.0
      %499 = vmatpush1.msra.mxu0 0.0
      %500 = vmatprep.subr.mxu0 0.0
      %501 = vmatpush1.msra.mxu0 0.0
      %502 = vmatprep.subr.mxu0 0.0
      %503 = vmatpush1.msra.mxu0 0.0
      %504 = vmatprep.subr.mxu0 0.0
      %505 = vmatpush1.msra.mxu0 0.0
      %506 = vmatprep.subr.mxu0 0.0
      %507 = vmatpush1.msra.mxu0 0.0
      %508 = vmatprep.subr.mxu0 0.0
      %509 = vmatpush1.msra.mxu0 0.0
      %510 = vmatprep.subr.mxu0 0.0
      %511 = vmatpush1.msra.mxu0 0.0
      %512 = vmatprep.subr.mxu0 0.0
      %513 = vmatpush1.msra.mxu0 0.0
      %514 = vmatprep.subr.mxu0 0.0
      %515 = vmatpush1.msra.mxu0 0.0
      %516 = vmatprep.subr.mxu0 0.0
      %517 = vmatpush1.msra.mxu0 0.0
      %518 = vmatprep.subr.mxu0 0.0
      %519 = vmatpush1.msra.mxu0 0.0
      %520 = vmatprep.subr.mxu0 0.0
      %521 = vmatpush1.msra.mxu0 0.0
      %522 = vmatprep.subr.mxu0 0.0
      %523 = vmatpush1.msra.mxu0 0.0
      %524 = vmatprep.subr.mxu0 0.0
      %525 = vmatpush1.msra.mxu0 0.0
      %526 = vmatprep.subr.mxu0 0.0
      %527 = vmatpush1.msra.mxu0 0.0
      %528 = vmatprep.subr.mxu0 0.0
      %529 = vmatpush1.msra.mxu0 0.0
      %530 = vmatprep.subr.mxu0 0.0
      %531 = vmatpush1.msra.mxu0 0.0
      %532 = vmatprep.subr.mxu0 0.0
      %533 = vmatpush1.msra.mxu0 0.0
      %534 = vmatprep.subr.mxu0 0.0
      %535 = vmatpush1.msra.mxu0 0.0
      %536 = vmatprep.subr.mxu0 0.0
      %537 = vmatpush1.msra.mxu0 0.0
      %538 = vmatprep.subr.mxu0 0.0
      %539 = vmatpush1.msra.mxu0 0.0
      %540 = vmatprep.subr.mxu0 0.0
      %541 = vmatpush1.msra.mxu0 0.0
      %542 = vmatprep.subr.mxu0 0.0
      %543 = vmatpush1.msra.mxu0 0.0
      %544 = vmatprep.subr.mxu0 0.0
      %545 = vmatpush1.msra.mxu0 0.0
      %546 = vmatprep.subr.mxu0 0.0
      %547 = vmatpush1.msra.mxu0 0.0
      %548 = vmatprep.mubr.f32.mxu0 0.0
      %549 = vmatmul.mubr.f32.gmra.mrb[0].mxu0 %v479
      %v550 = vpop.f32.mrb[0].mxu0
      %v551 = vadd.f32 %v399, %v550
      %v552 = vpop.f32.mrb[0].mxu0
      %553 = vdwg.mxu0
      %vm554 = vcmask 36864
      %v555 = vsel %vm554, %v475, -inf
      %v556 = vrot.slane %v555, 4
      %v557 = vmax.f32 %v555, %v556
      %v558 = vrot.slane %v557, 2
      %v559 = vmax.f32 %v557, %v558
      %v560 = vrot.slane %v559, 1
      %v561 = vmax.f32 %v559, %v560
      %v562 = vsel %vm554, %v551, -inf
      %v563 = vrot.slane %v562, 4
      %v564 = vmax.f32 %v562, %v563
      %v565 = vrot.slane %v564, 2
      %v566 = vmax.f32 %v564, %v565
      %v567 = vrot.slane %v566, 1
      %v568 = vmax.f32 %v566, %v567
      %v569 = vsub.f32 %v475, %v561
      %v570 = vsub.f32 %v551, %v568
      %v571 = vmul.f32 %v569, 1.442695
      %v572 = vpow.pop %v571
      %v573 = vmul.f32 %v570, 1.442695
      %v574 = vpow.pop %v573
      %575 = vxpose.xlu0.b32.start [1/16] %v572, 128
      %576 = vxpose.xlu0.b32.cont [2/16] 0.0, 128
      %577 = vxpose.xlu0.b32.cont [3/16] 0.0, 128
      %578 = vxpose.xlu0.b32.cont [4/16] 0.0, 128
      %579 = vxpose.xlu0.b32.cont [5/16] 0.0, 128
      %580 = vxpose.xlu0.b32.cont [6/16] 0.0, 128
      %581 = vxpose.xlu0.b32.cont [7/16] 0.0, 128
      %582 = vxpose.xlu0.b32.cont [8/16] 0.0, 128
      %583 = vxpose.xlu0.b32.cont [9/16] 0.0, 128
      %584 = vxpose.xlu0.b32.cont [10/16] 0.0, 128
      %585 = vxpose.xlu0.b32.cont [11/16] 0.0, 128
      %586 = vxpose.xlu0.b32.cont [12/16] 0.0, 128
      %587 = vxpose.xlu0.b32.cont [13/16] 0.0, 128
      %588 = vxpose.xlu0.b32.cont [14/16] 0.0, 128
      %589 = vxpose.xlu0.b32.cont [15/16] 0.0, 128
      %590 = vxpose.xlu0.b32.end [16/16] 0.0, 128
      %v591 = vpop.trf.xlu0
      %v592 = vpop.trf.xlu0
      %v593 = vpop.trf.xlu0
      %v594 = vpop.trf.xlu0
      %v595 = vpop.trf.xlu0
      %v596 = vpop.trf.xlu0
      %v597 = vpop.trf.xlu0
      %v598 = vpop.trf.xlu0
      %v599 = vpop.trf.xlu0
      %v600 = vpop.trf.xlu0
      %v601 = vpop.trf.xlu0
      %v602 = vpop.trf.xlu0
      %v603 = vpop.trf.xlu0
      %v604 = vpop.trf.xlu0
      %v605 = vpop.trf.xlu0
      %v606 = vpop.trf.xlu0
      %vm607 = vcmask 39936
      %v609 = vsel %vm607, %v591, 0
      %vm611 = vcmask 1044480
      %v612 = vsel %vm611, %v221, 0
      %614 = vmatprep.subr.mxu0 0.0
      %615 = vmatpush1.msra.mxu0 %v612
      %616 = vmatprep.subr.mxu0 0.0
      %617 = vmatpush1.msra.mxu0 0.0
      %618 = vmatprep.subr.mxu0 0.0
      %619 = vmatpush1.msra.mxu0 0.0
      %620 = vmatprep.subr.mxu0 0.0
      %621 = vmatpush1.msra.mxu0 0.0
      %622 = vmatprep.subr.mxu0 0.0
      %623 = vmatpush1.msra.mxu0 0.0
      %624 = vmatprep.subr.mxu0 0.0
      %625 = vmatpush1.msra.mxu0 0.0
      %626 = vmatprep.subr.mxu0 0.0
      %627 = vmatpush1.msra.mxu0 0.0
      %628 = vmatprep.subr.mxu0 0.0
      %629 = vmatpush1.msra.mxu0 0.0
      %630 = vmatprep.subr.mxu0 0.0
      %631 = vmatpush1.msra.mxu0 0.0
      %632 = vmatprep.subr.mxu0 0.0
      %633 = vmatpush1.msra.mxu0 0.0
      %634 = vmatprep.subr.mxu0 0.0
      %635 = vmatpush1.msra.mxu0 0.0
      %636 = vmatprep.subr.mxu0 0.0
      %637 = vmatpush1.msra.mxu0 0.0
      %638 = vmatprep.subr.mxu0 0.0
      %639 = vmatpush1.msra.mxu0 0.0
      %640 = vmatprep.subr.mxu0 0.0
      %641 = vmatpush1.msra.mxu0 0.0
      %642 = vmatprep.subr.mxu0 0.0
      %643 = vmatpush1.msra.mxu0 0.0
      %644 = vmatprep.subr.mxu0 0.0
      %645 = vmatpush1.msra.mxu0 0.0
      %646 = vmatprep.subr.mxu0 0.0
      %647 = vmatpush1.msra.mxu0 0.0
      %648 = vmatprep.subr.mxu0 0.0
      %649 = vmatpush1.msra.mxu0 0.0
      %650 = vmatprep.subr.mxu0 0.0
      %651 = vmatpush1.msra.mxu0 0.0
      %652 = vmatprep.subr.mxu0 0.0
      %653 = vmatpush1.msra.mxu0 0.0
      %654 = vmatprep.subr.mxu0 0.0
      %655 = vmatpush1.msra.mxu0 0.0
      %656 = vmatprep.subr.mxu0 0.0
      %657 = vmatpush1.msra.mxu0 0.0
      %658 = vmatprep.subr.mxu0 0.0
      %659 = vmatpush1.msra.mxu0 0.0
      %660 = vmatprep.subr.mxu0 0.0
      %661 = vmatpush1.msra.mxu0 0.0
      %662 = vmatprep.subr.mxu0 0.0
      %663 = vmatpush1.msra.mxu0 0.0
      %664 = vmatprep.subr.mxu0 0.0
      %665 = vmatpush1.msra.mxu0 0.0
      %666 = vmatprep.subr.mxu0 0.0
      %667 = vmatpush1.msra.mxu0 0.0
      %668 = vmatprep.subr.mxu0 0.0
      %669 = vmatpush1.msra.mxu0 0.0
      %670 = vmatprep.subr.mxu0 0.0
      %671 = vmatpush1.msra.mxu0 0.0
      %672 = vmatprep.subr.mxu0 0.0
      %673 = vmatpush1.msra.mxu0 0.0
      %674 = vmatprep.subr.mxu0 0.0
      %675 = vmatpush1.msra.mxu0 0.0
      %676 = vmatprep.subr.mxu0 0.0
      %677 = vmatpush1.msra.mxu0 0.0
      %678 = vmatprep.mubr.f32.mxu0 0.0
      %679 = vmatmul.mubr.f32.gmra.mrb[0].mxu0 %v609
      %v680 = vpop.f32.mrb[0].mxu0
      %v681 = vadd.f32 0.0, %v680
      %v682 = vpop.f32.mrb[0].mxu0
      %683 = vdwg.mxu0
      %684 = vxpose.xlu0.b32.start [1/16] %v574, 128
      %685 = vxpose.xlu0.b32.cont [2/16] 0.0, 128
      %686 = vxpose.xlu0.b32.cont [3/16] 0.0, 128
      %687 = vxpose.xlu0.b32.cont [4/16] 0.0, 128
      %688 = vxpose.xlu0.b32.cont [5/16] 0.0, 128
      %689 = vxpose.xlu0.b32.cont [6/16] 0.0, 128
      %690 = vxpose.xlu0.b32.cont [7/16] 0.0, 128
      %691 = vxpose.xlu0.b32.cont [8/16] 0.0, 128
      %692 = vxpose.xlu0.b32.cont [9/16] 0.0, 128
      %693 = vxpose.xlu0.b32.cont [10/16] 0.0, 128
      %694 = vxpose.xlu0.b32.cont [11/16] 0.0, 128
      %695 = vxpose.xlu0.b32.cont [12/16] 0.0, 128
      %696 = vxpose.xlu0.b32.cont [13/16] 0.0, 128
      %697 = vxpose.xlu0.b32.cont [14/16] 0.0, 128
      %698 = vxpose.xlu0.b32.cont [15/16] 0.0, 128
      %699 = vxpose.xlu0.b32.end [16/16] 0.0, 128
      %v700 = vpop.trf.xlu0
      %v701 = vpop.trf.xlu0
      %v702 = vpop.trf.xlu0
      %v703 = vpop.trf.xlu0
      %v704 = vpop.trf.xlu0
      %v705 = vpop.trf.xlu0
      %v706 = vpop.trf.xlu0
      %v707 = vpop.trf.xlu0
      %v708 = vpop.trf.xlu0
      %v709 = vpop.trf.xlu0
      %v710 = vpop.trf.xlu0
      %v711 = vpop.trf.xlu0
      %v712 = vpop.trf.xlu0
      %v713 = vpop.trf.xlu0
      %v714 = vpop.trf.xlu0
      %v715 = vpop.trf.xlu0
      %v717 = vsel %vm607, %v700, 0
      %v719 = vsel %vm611, %v222, 0
      %721 = vmatprep.subr.mxu0 0.0
      %722 = vmatpush1.msra.mxu0 %v719
      %723 = vmatprep.subr.mxu0 0.0
      %724 = vmatpush1.msra.mxu0 0.0
      %725 = vmatprep.subr.mxu0 0.0
      %726 = vmatpush1.msra.mxu0 0.0
      %727 = vmatprep.subr.mxu0 0.0
      %728 = vmatpush1.msra.mxu0 0.0
      %729 = vmatprep.subr.mxu0 0.0
      %730 = vmatpush1.msra.mxu0 0.0
      %731 = vmatprep.subr.mxu0 0.0
      %732 = vmatpush1.msra.mxu0 0.0
      %733 = vmatprep.subr.mxu0 0.0
      %734 = vmatpush1.msra.mxu0 0.0
      %735 = vmatprep.subr.mxu0 0.0
      %736 = vmatpush1.msra.mxu0 0.0
      %737 = vmatprep.subr.mxu0 0.0
      %738 = vmatpush1.msra.mxu0 0.0
      %739 = vmatprep.subr.mxu0 0.0
      %740 = vmatpush1.msra.mxu0 0.0
      %741 = vmatprep.subr.mxu0 0.0
      %742 = vmatpush1.msra.mxu0 0.0
      %743 = vmatprep.subr.mxu0 0.0
      %744 = vmatpush1.msra.mxu0 0.0
      %745 = vmatprep.subr.mxu0 0.0
      %746 = vmatpush1.msra.mxu0 0.0
      %747 = vmatprep.subr.mxu0 0.0
      %748 = vmatpush1.msra.mxu0 0.0
      %749 = vmatprep.subr.mxu0 0.0
      %750 = vmatpush1.msra.mxu0 0.0
      %751 = vmatprep.subr.mxu0 0.0
      %752 = vmatpush1.msra.mxu0 0.0
      %753 = vmatprep.subr.mxu0 0.0
      %754 = vmatpush1.msra.mxu0 0.0
      %755 = vmatprep.subr.mxu0 0.0
      %756 = vmatpush1.msra.mxu0 0.0
      %757 = vmatprep.subr.mxu0 0.0
      %758 = vmatpush1.msra.mxu0 0.0
      %759 = vmatprep.subr.mxu0 0.0
      %760 = vmatpush1.msra.mxu0 0.0
      %761 = vmatprep.subr.mxu0 0.0
      %762 = vmatpush1.msra.mxu0 0.0
      %763 = vmatprep.subr.mxu0 0.0
      %764 = vmatpush1.msra.mxu0 0.0
      %765 = vmatprep.subr.mxu0 0.0
      %766 = vmatpush1.msra.mxu0 0.0
      %767 = vmatprep.subr.mxu0 0.0
      %768 = vmatpush1.msra.mxu0 0.0
      %769 = vmatprep.subr.mxu0 0.0
      %770 = vmatpush1.msra.mxu0 0.0
      %771 = vmatprep.subr.mxu0 0.0
      %772 = vmatpush1.msra.mxu0 0.0
      %773 = vmatprep.subr.mxu0 0.0
      %774 = vmatpush1.msra.mxu0 0.0
      %775 = vmatprep.subr.mxu0 0.0
      %776 = vmatpush1.msra.mxu0 0.0
      %777 = vmatprep.subr.mxu0 0.0
      %778 = vmatpush1.msra.mxu0 0.0
      %779 = vmatprep.subr.mxu0 0.0
      %780 = vmatpush1.msra.mxu0 0.0
      %781 = vmatprep.subr.mxu0 0.0
      %782 = vmatpush1.msra.mxu0 0.0
      %783 = vmatprep.subr.mxu0 0.0
      %784 = vmatpush1.msra.mxu0 0.0
      %785 = vmatprep.mubr.f32.mxu0 0.0
      %786 = vmatmul.mubr.f32.gmra.mrb[0].mxu0 %v717
      %v787 = vpop.f32.mrb[0].mxu0
      %v788 = vadd.f32 0.0, %v787
      %v789 = vpop.f32.mrb[0].mxu0
      %790 = vdwg.mxu0
      %v791 = vsel %vm554, %v572, 0.0
      %v792 = vrot.slane %v791, 4
      %v793 = vadd.f32 %v791, %v792
      %v794 = vrot.slane %v793, 2
      %v795 = vadd.f32 %v793, %v794
      %v796 = vrot.slane %v795, 1
      %v797 = vadd.f32 %v795, %v796
      %v798 = vsel %vm554, %v574, 0.0
      %v799 = vrot.slane %v798, 4
      %v800 = vadd.f32 %v798, %v799
      %v801 = vrot.slane %v800, 2
      %v802 = vadd.f32 %v800, %v801
      %v803 = vrot.slane %v802, 1
      %v804 = vadd.f32 %v802, %v803
      %v805 = vrcp.pop %v797
      %v806 = vmul.f32 1.0, %v805
      %v807 = vrcp.pop %v804
      %v808 = vmul.f32 1.0, %v807
      %810 = vbcast.lane.b32.xlu0 %v806, 256
      %v811 = vpop.permute.xlu0 %810
      %813 = vbcast.lane.b32.xlu0 %v808, 256
      %v814 = vpop.permute.xlu0 %813
      %v815 = vmul.f32 %v681, %v811
      %v816 = vmul.f32 %v788, %v814
      %vm817 = vcmask 258048
      %818 = vst.msk [vmem:[%s219] sm:$0x1f] %vm817, %v815
      %819 = vst.msk [vmem:[%s219 + $0x8] sm:$0x1f] %vm817, %v816
      %s820 = smul.u32 2, %s14
      %p821 = scmp.lt.s32.totalorder %s820, 3
      %s822 = scalar_select %p821, %s820, 3
      %s823 = smul.addr %s822, 8
      %s824 = scalar_lea.vmem %s3, %s823
      // Predicated region
      $region33: #{tpu_custom_call.1} parent=31 // pred_check
        %p825 = pneg %p110
      $region34: #{tpu_custom_call.1} parent=31 // pred_check_branch
        %827 = sbr.rel (%p825) target = $region36
      $region35: #{tpu_custom_call.1} parent=31 // pred_region
        %s828 = smul.u32 2, %s14
      $region36: #{tpu_custom_call.1} parent=31 // pred_fallthru
        _
    $region32: #{tpu_custom_call.1} parent=5 // pred_fallthru
      _
    %p829 = scmp.le.s32.totalorder 2, %s9
    // Predicated region
    $region37: #{tpu_custom_call.1} parent=5 // pred_check
      %p830 = pneg %p829
    $region38: #{tpu_custom_call.1} parent=5 // pred_check_branch
      %832 = sbr.rel (%p830) target = $region40
    $region39: #{tpu_custom_call.1} parent=5 // pred_region
      %s833 = ssub.s32 %s9, 2
      // Predicated region
      $region41: #{tpu_custom_call.1} parent=39 // pred_check
        %p834 = pneg %p116
      $region42: #{tpu_custom_call.1} parent=39 // pred_check_branch
        %836 = sbr.rel (%p834) target = $region44
      $region43: #{tpu_custom_call.1} parent=39 // pred_region
        %s837 = smul.u32 2, %s15
        %p838 = scmp.lt.s32.totalorder %s837, 3
        %s839 = scalar_select %p838, %s837, 3
        %s840 = smul.addr %s839, 8
        %s841 = scalar_lea.vmem %s3, %s840
      $region44: #{tpu_custom_call.1} parent=39 // pred_fallthru
        _
    $region40: #{tpu_custom_call.1} parent=5 // pred_fallthru
      _
  $region6: #{tpu_custom_call.1} parent=0 // loop_footer
    %s13 = sadd.s32 1, %s9
  $region7: #{tpu_custom_call.1} parent=0 // loop_footer_branch
    %8 = sbr.rel target = $region3
  $region8: #{tpu_custom_call.1} parent=0 // loop_exit
    _

</llo_original>
